<compile_context>
chip_gen: v7x
topology: tpu7x:2x2x1
jax: 0.10.0
libtpu: 0.0.40
codegen_flags: <defaults>
</compile_context>

<pallas_src>
import jax
import jax.numpy as jnp
import numpy as np
from jax.experimental import pallas as pl
from jax.experimental.pallas import tpu as pltpu


def card_embedding_kernel(idx_ref, table_ref, out_ref):
    idx = idx_ref[...]                                   # (TB, N) int32
    tb, n = idx.shape
    vocab_p = table_ref.shape[0]                         # 128 (lane-dense)

    # Invalid cards (idx < 1) -> the all-zero pad row; no mask work needed
    # in the wide accumulation below.  Done on the narrow (TB, N) array.
    x = jnp.where(idx >= 1, idx, vocab_p - 1)            # (TB, N)

    cols = jax.lax.broadcasted_iota(jnp.int32, (tb, vocab_p), 1)

    def onehot(j):                                       # (TB, 128) f32
        return (cols == x[:, j][:, None]).astype(jnp.float32)

    # Multi-hot counts[b, v] = #{ j : x[b, j] == v }.
    # Initialize from card 0 (no zeros+add pass), then accumulate pairwise
    # so `counts` is loaded/stored ~N/2 times and live temporaries stay
    # bounded (counts + two one-hots).
    counts = onehot(0)
    if n > 1:
        counts = counts + onehot(1)
    j = 2
    while j + 1 < n:
        counts = counts + (onehot(j) + onehot(j + 1))
        j += 2
    if j < n:
        counts = counts + onehot(j)

    # Single lane-dense MXU matmul: (TB, 128) @ (128, dim).
    out_ref[...] = jnp.dot(counts, table_ref[...],
                           preferred_element_type=jnp.float32)


def _round_up(x, m):
    return (x + m - 1) // m * m


def card_embedding(idx, card_w, rank_w, suit_w, *, block_b=4096):
    B, N = idx.shape
    vocab, dim = card_w.shape

    # Fuse the three tiny tables once (52*dim adds, negligible).
    v = jnp.arange(vocab, dtype=jnp.int32)
    fused = (card_w + rank_w[v // 4] + suit_w[v % 4]).astype(jnp.float32)

    # Pad vocab straight to 128 so counts / compares / matmul LHS are
    # lane-dense.  Rows >= vocab MUST stay exactly zero (invalid-index target).
    vocab_p = 128
    fused_p = jnp.zeros((vocab_p, dim), jnp.float32).at[:vocab, :].set(fused)

    # Batch tiling: big tiles amortize per-grid-step overhead; keep >= 2 grid
    # steps when the batch allows so v7x's two TensorCores both get work.
    b8 = _round_up(B, 8)
    tb = min(_round_up(block_b, 8), b8)
    if b8 // tb < 2 and b8 >= 16:
        tb = _round_up(pl.cdiv(b8, 2), 8)
    b_p = _round_up(b8, tb)

    idx_p = idx.astype(jnp.int32)
    if b_p != B:
        # Padded rows hold index 0 -> remapped to the zero row in the kernel.
        idx_p = jnp.pad(idx_p, ((0, b_p - B), (0, 0)))

    out = pl.pallas_call(
        card_embedding_kernel,
        out_shape=jax.ShapeDtypeStruct((b_p, dim), jnp.float32),
        grid=(b_p // tb,),
        in_specs=[
            pl.BlockSpec((tb, N), lambda i: (i, 0)),          # batch tile of idx
            pl.BlockSpec((vocab_p, dim), lambda i: (0, 0)),   # fused table, resident
        ],
        out_specs=pl.BlockSpec((tb, dim), lambda i: (i, 0)),  # unpadded dim
        compiler_params=pltpu.CompilerParams(
            # Per-tile VMEM at block_b=4096 is a few MiB (fits the v5e 16 MiB
            # scoped default).  If block_b is raised further, also raise
            # vmem_limit_bytes here.
            dimension_semantics=("parallel",)),
    )(idx_p, fused_p)

    # No-op whenever tb divides B (e.g. production batches that are a
    # multiple of the tile); otherwise a single small row slice.
    return out if b_p == B else out[:B]


def card_embedding_ref(idx, card_w, rank_w, suit_w):
    B, N = idx.shape
    flat = idx.reshape(-1)
    valid = (flat >= 1).astype(jnp.float32)
    x = jnp.maximum(flat, 0)
    embs = card_w[x] + rank_w[x // 4] + suit_w[x % 4]
    embs = embs * valid[:, None]
    return embs.reshape(B, N, -1).sum(axis=1)


if __name__ == "__main__":
    dim = 32          # embedding dim
    B = 2             # batch
    N = 8             # num_cards

    key = jax.random.PRNGKey(0)
    k_idx, k_card, k_rank, k_suit = jax.random.split(key, 4)

    # Deterministic "nn.Embedding"-style parameters (N(0, 1), like torch).
    card_w = jax.random.normal(k_card, (52, dim), dtype=jnp.float32)
    rank_w = jax.random.normal(k_rank, (13, dim), dtype=jnp.float32)
    suit_w = jax.random.normal(k_suit, (4, dim), dtype=jnp.float32)

    # Card indices in [-1, 51]; -1 / 0 exercise the invalid-card path.
    idx = jax.random.randint(k_idx, (B, N), -1, 52, dtype=jnp.int32)

    out = jax.block_until_ready(card_embedding(idx, card_w, rank_w, suit_w))
    ref = jax.block_until_ready(card_embedding_ref(idx, card_w, rank_w, suit_w))

    assert out.shape == (B, dim)
    np.testing.assert_allclose(np.asarray(out), np.asarray(ref),
                               rtol=1e-5, atol=1e-5)
    print("KERNEL_OK")
</pallas_src>

<mosaic_0001>
module attributes {stable_mosaic.version = 11 : i64} {
  func.func @card_embedding_kernel(%arg0: i32, %arg1: memref<8x8xi32, #tpu.memory_space<vmem>>, %arg2: memref<128x32xf32, #tpu.memory_space<vmem>>, %arg3: memref<8x32xf32, #tpu.memory_space<vmem>>) attributes {dimension_semantics = [#tpu.dimension_semantics<parallel>], iteration_bounds = array<i64: 1>, scalar_prefetch = 0 : i64, scratch_operands = 0 : i64, tpu.core_type = #tpu.core_type<tc>, window_params = [{transform_indices = @transform_0, window_bounds = array<i64: 8, 8>}, {pipeline_mode = #tpu.pipeline_mode<synchronous>, transform_indices = @transform_1, window_bounds = array<i64: 128, 32>}, {transform_indices = @transform_2, window_bounds = array<i64: 8, 32>}]} {
    %c0 = arith.constant 0 : index
    %c0_0 = arith.constant 0 : index
    %0 = vector.load %arg1[%c0, %c0_0] : memref<8x8xi32, #tpu.memory_space<vmem>>, vector<8x8xi32>
    %c1_i32 = arith.constant 1 : i32
    %1 = vector.broadcast %c1_i32 : i32 to vector<8x8xi32>
    %2 = arith.cmpi sge, %0, %1 : vector<8x8xi32>
    %c127_i32 = arith.constant 127 : i32
    %3 = vector.broadcast %c127_i32 : i32 to vector<8x8xi32>
    %4 = arith.select %2, %0, %3 : vector<8x8xi1>, vector<8x8xi32>
    %5 = tpu.iota {dimensions = array<i32: 1>} : vector<8x128xi32>
    %6 = vector.extract_strided_slice %4 {offsets = [0, 0], sizes = [8, 1], strides = [1, 1]} : vector<8x8xi32> to vector<8x1xi32>
    %7 = vector.shape_cast %6 : vector<8x1xi32> to vector<8xi32>
    %8 = vector.shape_cast %7 : vector<8xi32> to vector<8x1xi32>
    %9 = vector.broadcast %8 : vector<8x1xi32> to vector<8x128xi32>
    %10 = arith.cmpi eq, %5, %9 : vector<8x128xi32>
    %11 = arith.extui %10 : vector<8x128xi1> to vector<8x128xi32>
    %12 = arith.sitofp %11 : vector<8x128xi32> to vector<8x128xf32>
    %13 = vector.extract_strided_slice %4 {offsets = [0, 1], sizes = [8, 1], strides = [1, 1]} : vector<8x8xi32> to vector<8x1xi32>
    %14 = vector.shape_cast %13 : vector<8x1xi32> to vector<8xi32>
    %15 = vector.shape_cast %14 : vector<8xi32> to vector<8x1xi32>
    %16 = vector.broadcast %15 : vector<8x1xi32> to vector<8x128xi32>
    %17 = arith.cmpi eq, %5, %16 : vector<8x128xi32>
    %18 = arith.extui %17 : vector<8x128xi1> to vector<8x128xi32>
    %19 = arith.sitofp %18 : vector<8x128xi32> to vector<8x128xf32>
    %20 = arith.addf %12, %19 : vector<8x128xf32>
    %21 = vector.extract_strided_slice %4 {offsets = [0, 2], sizes = [8, 1], strides = [1, 1]} : vector<8x8xi32> to vector<8x1xi32>
    %22 = vector.shape_cast %21 : vector<8x1xi32> to vector<8xi32>
    %23 = vector.shape_cast %22 : vector<8xi32> to vector<8x1xi32>
    %24 = vector.broadcast %23 : vector<8x1xi32> to vector<8x128xi32>
    %25 = arith.cmpi eq, %5, %24 : vector<8x128xi32>
    %26 = arith.extui %25 : vector<8x128xi1> to vector<8x128xi32>
    %27 = arith.sitofp %26 : vector<8x128xi32> to vector<8x128xf32>
    %28 = vector.extract_strided_slice %4 {offsets = [0, 3], sizes = [8, 1], strides = [1, 1]} : vector<8x8xi32> to vector<8x1xi32>
    %29 = vector.shape_cast %28 : vector<8x1xi32> to vector<8xi32>
    %30 = vector.shape_cast %29 : vector<8xi32> to vector<8x1xi32>
    %31 = vector.broadcast %30 : vector<8x1xi32> to vector<8x128xi32>
    %32 = arith.cmpi eq, %5, %31 : vector<8x128xi32>
    %33 = arith.extui %32 : vector<8x128xi1> to vector<8x128xi32>
    %34 = arith.sitofp %33 : vector<8x128xi32> to vector<8x128xf32>
    %35 = arith.addf %27, %34 : vector<8x128xf32>
    %36 = arith.addf %20, %35 : vector<8x128xf32>
    %37 = vector.extract_strided_slice %4 {offsets = [0, 4], sizes = [8, 1], strides = [1, 1]} : vector<8x8xi32> to vector<8x1xi32>
    %38 = vector.shape_cast %37 : vector<8x1xi32> to vector<8xi32>
    %39 = vector.shape_cast %38 : vector<8xi32> to vector<8x1xi32>
    %40 = vector.broadcast %39 : vector<8x1xi32> to vector<8x128xi32>
    %41 = arith.cmpi eq, %5, %40 : vector<8x128xi32>
    %42 = arith.extui %41 : vector<8x128xi1> to vector<8x128xi32>
    %43 = arith.sitofp %42 : vector<8x128xi32> to vector<8x128xf32>
    %44 = vector.extract_strided_slice %4 {offsets = [0, 5], sizes = [8, 1], strides = [1, 1]} : vector<8x8xi32> to vector<8x1xi32>
    %45 = vector.shape_cast %44 : vector<8x1xi32> to vector<8xi32>
    %46 = vector.shape_cast %45 : vector<8xi32> to vector<8x1xi32>
    %47 = vector.broadcast %46 : vector<8x1xi32> to vector<8x128xi32>
    %48 = arith.cmpi eq, %5, %47 : vector<8x128xi32>
    %49 = arith.extui %48 : vector<8x128xi1> to vector<8x128xi32>
    %50 = arith.sitofp %49 : vector<8x128xi32> to vector<8x128xf32>
    %51 = arith.addf %43, %50 : vector<8x128xf32>
    %52 = arith.addf %36, %51 : vector<8x128xf32>
    %53 = vector.extract_strided_slice %4 {offsets = [0, 6], sizes = [8, 1], strides = [1, 1]} : vector<8x8xi32> to vector<8x1xi32>
    %54 = vector.shape_cast %53 : vector<8x1xi32> to vector<8xi32>
    %55 = vector.shape_cast %54 : vector<8xi32> to vector<8x1xi32>
    %56 = vector.broadcast %55 : vector<8x1xi32> to vector<8x128xi32>
    %57 = arith.cmpi eq, %5, %56 : vector<8x128xi32>
    %58 = arith.extui %57 : vector<8x128xi1> to vector<8x128xi32>
    %59 = arith.sitofp %58 : vector<8x128xi32> to vector<8x128xf32>
    %60 = vector.extract_strided_slice %4 {offsets = [0, 7], sizes = [8, 1], strides = [1, 1]} : vector<8x8xi32> to vector<8x1xi32>
    %61 = vector.shape_cast %60 : vector<8x1xi32> to vector<8xi32>
    %62 = vector.shape_cast %61 : vector<8xi32> to vector<8x1xi32>
    %63 = vector.broadcast %62 : vector<8x1xi32> to vector<8x128xi32>
    %64 = arith.cmpi eq, %5, %63 : vector<8x128xi32>
    %65 = arith.extui %64 : vector<8x128xi1> to vector<8x128xi32>
    %66 = arith.sitofp %65 : vector<8x128xi32> to vector<8x128xf32>
    %67 = arith.addf %59, %66 : vector<8x128xf32>
    %68 = arith.addf %52, %67 : vector<8x128xf32>
    %c0_1 = arith.constant 0 : index
    %c0_2 = arith.constant 0 : index
    %69 = vector.load %arg2[%c0_1, %c0_2] : memref<128x32xf32, #tpu.memory_space<vmem>>, vector<128x32xf32>
    %cst = arith.constant dense<0.000000e+00> : vector<8x32xf32>
    %70 = tpu.matmul %68, %69, %cst {dimension_numbers = #tpu.dot_dimension_numbers<[1], [0], [0], [1], [0, 0, 1, 1], [], []>} : vector<8x128xf32>, vector<128x32xf32>, vector<8x32xf32> -> vector<8x32xf32>
    %c0_3 = arith.constant 0 : index
    %c0_4 = arith.constant 0 : index
    %71 = vector.load %arg3[%c0_3, %c0_4] : memref<8x32xf32, #tpu.memory_space<vmem>>, vector<8x32xf32>
    tpu.vector_store %arg3[%c0_3, %c0_4], %70 {strides = array<i32>} : memref<8x32xf32, #tpu.memory_space<vmem>>, vector<8x32xf32>,
    return
  }
  func.func @transform_0(%arg0: i32) -> (i32, i32) {
    %c0_i32 = arith.constant 0 : i32
    %c0_i32_0 = arith.constant 0 : i32
    return %arg0, %c0_i32 : i32, i32
  }
  func.func @transform_1(%arg0: i32) -> (i32, i32) {
    %c0_i32 = arith.constant 0 : i32
    %c0_i32_0 = arith.constant 0 : i32
    %c0_i32_1 = arith.constant 0 : i32
    return %c0_i32, %c0_i32_0 : i32, i32
  }
  func.func @transform_2(%arg0: i32) -> (i32, i32) {
    %c0_i32 = arith.constant 0 : i32
    %c0_i32_0 = arith.constant 0 : i32
    return %arg0, %c0_i32 : i32, i32
  }
}

</mosaic_0001>

<llo_original>
// kernel: tpu_custom_call.1
$region0: #{tpu_custom_call.1}
  #allocation0 [shape = 'u32[]', space=smem, size = 0x4, offset = 0x4, fixed_abs, tag = 'smem constant byte address 0x4 - core index']
  #allocation1 [shape = 'u32[144,128]{1,0:T(1,128)}', space=vmem, size = 0x12000, scoped, tag = 'internal scratch']
  %s0 = inlined_call_operand.vmem [shape: s32[8,8], index: 0, kind: input, shape index: {}]
  %s1 = inlined_call_operand.vmem [shape: f32[128,32], index: 1, kind: input, shape index: {}]
  %s2 = inlined_call_operand.hbm [shape: f32[8,32], index: 2, kind: output, shape index: {}]
  %s3 = sld [smem:[#allocation0]]
  $region18: #{tpu_custom_call.1} parent=0
    _
  %s5 = ssub.s32 1, %s3
  %s6 = scalar_select 0, %s5, %s3
  $region1: #{tpu_custom_call.1} parent=0
    #allocation2 [shape = 'u8[4096]{0}', space=vmem, size = 0x1000, scoped, tag = 'output window, operand 0, single buffered']
    #allocation3 [shape = 's32[1]{0}', space=sflag, size = 0x4, scoped, tag = 'scoped memory for tpu_custom_call.1']
    %7 = vsyncpa [#allocation3], 0
    // Predicated region
    $region2: #{tpu_custom_call.1} parent=1 // pred_check
      _
    $region3: #{tpu_custom_call.1} parent=1 // pred_check_branch
      %9 = sbr.rel (0) target = $region5
    $region4: #{tpu_custom_call.1} parent=1 // pred_region
      _
    $region5: #{tpu_custom_call.1} parent=1 // pred_fallthru
      _
    // Predicated region
    $region6: #{tpu_custom_call.1} parent=1 // pred_check
      _
    $region7: #{tpu_custom_call.1} parent=1 // pred_check_branch
      %11 = sbr.rel (0) target = $region9
    $region8: #{tpu_custom_call.1} parent=1 // pred_region
      _
    $region9: #{tpu_custom_call.1} parent=1 // pred_fallthru
      _
    %v12 = vld [vmem:[%s0] sm:$0xff]
    %vm13 = vcmp.ge.s32.totalorder %v12, 1
    %v14 = vsel %vm13, %v12, 127
    %v15 = vlaneseq
    %v16 = vand.u32 %v15, 127
    %17 = vset.pattern.permute.xlu0 0
    %18 = vperm.xlu0 %17, %v14
    %v19 = vpop.permute.xlu0 %18
    %vm20 = vcmp.eq.s32.totalorder %v16, %v19
    %v21 = vsel %vm20, 1, 0
    %v22 = vcvt.s32.f32 %v21
    %23 = vset.pattern.permute.xlu0 1
    %24 = vperm.xlu0 %23, %v14
    %v25 = vpop.permute.xlu0 %24
    %vm26 = vcmp.eq.s32.totalorder %v16, %v25
    %v27 = vsel %vm26, 1, 0
    %v28 = vcvt.s32.f32 %v27
    %v29 = vadd.f32 %v22, %v28
    %30 = vset.pattern.permute.xlu0 2
    %31 = vperm.xlu0 %30, %v14
    %v32 = vpop.permute.xlu0 %31
    %vm33 = vcmp.eq.s32.totalorder %v16, %v32
    %v34 = vsel %vm33, 1, 0
    %v35 = vcvt.s32.f32 %v34
    %36 = vset.pattern.permute.xlu0 3
    %37 = vperm.xlu0 %36, %v14
    %v38 = vpop.permute.xlu0 %37
    %vm39 = vcmp.eq.s32.totalorder %v16, %v38
    %v40 = vsel %vm39, 1, 0
    %v41 = vcvt.s32.f32 %v40
    %v42 = vadd.f32 %v35, %v41
    %v43 = vadd.f32 %v29, %v42
    %44 = vset.pattern.permute.xlu0 4
    %45 = vperm.xlu0 %44, %v14
    %v46 = vpop.permute.xlu0 %45
    %vm47 = vcmp.eq.s32.totalorder %v16, %v46
    %v48 = vsel %vm47, 1, 0
    %v49 = vcvt.s32.f32 %v48
    %50 = vset.pattern.permute.xlu0 5
    %51 = vperm.xlu0 %50, %v14
    %v52 = vpop.permute.xlu0 %51
    %vm53 = vcmp.eq.s32.totalorder %v16, %v52
    %v54 = vsel %vm53, 1, 0
    %v55 = vcvt.s32.f32 %v54
    %v56 = vadd.f32 %v49, %v55
    %v57 = vadd.f32 %v43, %v56
    %58 = vset.pattern.permute.xlu0 6
    %59 = vperm.xlu0 %58, %v14
    %v60 = vpop.permute.xlu0 %59
    %vm61 = vcmp.eq.s32.totalorder %v16, %v60
    %v62 = vsel %vm61, 1, 0
    %v63 = vcvt.s32.f32 %v62
    %64 = vset.pattern.permute.xlu0 7
    %65 = vperm.xlu0 %64, %v14
    %v66 = vpop.permute.xlu0 %65
    %vm67 = vcmp.eq.s32.totalorder %v16, %v66
    %v68 = vsel %vm67, 1, 0
    %v69 = vcvt.s32.f32 %v68
    %v70 = vadd.f32 %v63, %v69
    %v71 = vadd.f32 %v57, %v70
    %v72 = vld [vmem:[%s1] sm:$0xff]
    %v73 = vld [vmem:[%s1 + $0x8] sm:$0xff]
    %v74 = vld [vmem:[%s1 + $0x10] sm:$0xff]
    %v75 = vld [vmem:[%s1 + $0x18] sm:$0xff]
    %v76 = vld [vmem:[%s1 + $0x20] sm:$0xff]
    %v77 = vld [vmem:[%s1 + $0x28] sm:$0xff]
    %v78 = vld [vmem:[%s1 + $0x30] sm:$0xff]
    %v79 = vld [vmem:[%s1 + $0x38] sm:$0xff]
    %v80 = vld [vmem:[%s1 + $0x40] sm:$0xff]
    %v81 = vld [vmem:[%s1 + $0x48] sm:$0xff]
    %v82 = vld [vmem:[%s1 + $0x50] sm:$0xff]
    %v83 = vld [vmem:[%s1 + $0x58] sm:$0xff]
    %v84 = vld [vmem:[%s1 + $0x60] sm:$0xff]
    %v85 = vld [vmem:[%s1 + $0x68] sm:$0xff]
    %v86 = vld [vmem:[%s1 + $0x70] sm:$0xff]
    %v87 = vld [vmem:[%s1 + $0x78] sm:$0xff]
    %88 = vmatprep.subr.mxu0 0.0
    %89 = vmatpush1.msra.mxu0 %v72
    %90 = vmatprep.subr.mxu0 0.0
    %91 = vmatpush1.msra.mxu0 %v73
    %92 = vmatprep.subr.mxu0 0.0
    %93 = vmatpush1.msra.mxu0 %v74
    %94 = vmatprep.subr.mxu0 0.0
    %95 = vmatpush1.msra.mxu0 %v75
    %96 = vmatprep.subr.mxu0 0.0
    %97 = vmatpush1.msra.mxu0 %v76
    %98 = vmatprep.subr.mxu0 0.0
    %99 = vmatpush1.msra.mxu0 %v77
    %100 = vmatprep.subr.mxu0 0.0
    %101 = vmatpush1.msra.mxu0 %v78
    %102 = vmatprep.subr.mxu0 0.0
    %103 = vmatpush1.msra.mxu0 %v79
    %104 = vmatprep.subr.mxu0 0.0
    %105 = vmatpush1.msra.mxu0 %v80
    %106 = vmatprep.subr.mxu0 0.0
    %107 = vmatpush1.msra.mxu0 %v81
    %108 = vmatprep.subr.mxu0 0.0
    %109 = vmatpush1.msra.mxu0 %v82
    %110 = vmatprep.subr.mxu0 0.0
    %111 = vmatpush1.msra.mxu0 %v83
    %112 = vmatprep.subr.mxu0 0.0
    %113 = vmatpush1.msra.mxu0 %v84
    %114 = vmatprep.subr.mxu0 0.0
    %115 = vmatpush1.msra.mxu0 %v85
    %116 = vmatprep.subr.mxu0 0.0
    %117 = vmatpush1.msra.mxu0 %v86
    %118 = vmatprep.subr.mxu0 0.0
    %119 = vmatpush1.msra.mxu0 %v87
    %120 = vmatprep.subr.mxu0 0.0
    %121 = vmatpush1.msra.mxu0 0.0
    %122 = vmatprep.subr.mxu0 0.0
    %123 = vmatpush1.msra.mxu0 0.0
    %124 = vmatprep.subr.mxu0 0.0
    %125 = vmatpush1.msra.mxu0 0.0
    %126 = vmatprep.subr.mxu0 0.0
    %127 = vmatpush1.msra.mxu0 0.0
    %128 = vmatprep.subr.mxu0 0.0
    %129 = vmatpush1.msra.mxu0 0.0
    %130 = vmatprep.subr.mxu0 0.0
    %131 = vmatpush1.msra.mxu0 0.0
    %132 = vmatprep.subr.mxu0 0.0
    %133 = vmatpush1.msra.mxu0 0.0
    %134 = vmatprep.subr.mxu0 0.0
    %135 = vmatpush1.msra.mxu0 0.0
    %136 = vmatprep.subr.mxu0 0.0
    %137 = vmatpush1.msra.mxu0 0.0
    %138 = vmatprep.subr.mxu0 0.0
    %139 = vmatpush1.msra.mxu0 0.0
    %140 = vmatprep.subr.mxu0 0.0
    %141 = vmatpush1.msra.mxu0 0.0
    %142 = vmatprep.subr.mxu0 0.0
    %143 = vmatpush1.msra.mxu0 0.0
    %144 = vmatprep.subr.mxu0 0.0
    %145 = vmatpush1.msra.mxu0 0.0
    %146 = vmatprep.subr.mxu0 0.0
    %147 = vmatpush1.msra.mxu0 0.0
    %148 = vmatprep.subr.mxu0 0.0
    %149 = vmatpush1.msra.mxu0 0.0
    %150 = vmatprep.subr.mxu0 0.0
    %151 = vmatpush1.msra.mxu0 0.0
    %152 = vmatprep.mubr.f32.mxu0 0.0
    %153 = vmatmul.mubr.f32.gmra.mrb[0].mxu0 %v71
    %v154 = vpop.f32.mrb[0].mxu0
    %v155 = vadd.f32 0.0, %v154
    %v156 = vpop.f32.mrb[0].mxu0
    %157 = vdwg.mxu0
    %vm158 = vcmask 261120
    %159 = vst.msk [vmem:[#allocation2] sm:$0xff] %vm158, %v155
    // Predicated region
    $region10: #{tpu_custom_call.1} parent=1 // pred_check
      _
    $region11: #{tpu_custom_call.1} parent=1 // pred_check_branch
      %161 = sbr.rel (0) target = $region13
    $region12: #{tpu_custom_call.1} parent=1 // pred_region
      %s163 = ssub.s32 128, 128
      %164 = vsyncadd [#allocation3], %s163
      %s166 = sshll.u32 [#allocation2], 4
      %s167 = int_to_ptr.vmem [resolvable:$true] %s166
      %169 = dma.vmem_to_hbm [thread:$0]  %s167, 128, %s2, [#allocation3]
    $region13: #{tpu_custom_call.1} parent=1 // pred_fallthru
      _
    // Predicated region
    $region14: #{tpu_custom_call.1} parent=1 // pred_check
      _
    $region15: #{tpu_custom_call.1} parent=1 // pred_check_branch
      %171 = sbr.rel (0) target = $region17
    $region16: #{tpu_custom_call.1} parent=1 // pred_region
      %172 = dma.done [#allocation3], 128
    $region17: #{tpu_custom_call.1} parent=1 // pred_fallthru
      _
    %173 = vsyncpa [#allocation3], 1

</llo_original>
